<compile_context>
chip_gen: v7x
topology: tpu7x:2x2x1
jax: 0.10.0
libtpu: 0.0.40
codegen_flags: <defaults>
</compile_context>

<pallas_src>
import jax
import jax.numpy as jnp
from jax import lax
from jax.experimental import pallas as pl
from jax.experimental.pallas import tpu as pltpu

EPS = 1e-5
H = W = 7
WP = 8             # W padded to the 8-sublane tile
HP = H + 2         # H plus the 1-row conv halo on each side
CIN = 128
COUT = 32
KH = KW = 3
NPIX = H * W       # 49 real pixels -> BN batch-stat denominator (N=1)


def bn_relu_conv_kernel(xc_ref, w_ref, gamma_ref, beta_ref, o_ref):
    # xc_ref:     [HP, WP, CIN]  centre-padded input: xc[h, w, c] = x[h-1, w, c] for
    #             1<=h<=7, 0<=w<=6; zero at halo rows (h=0,8) and the pad column w=7.
    # w_ref:      [KH*KW*CIN, COUT] conv weights, tap-major ((kh*3+kw)*CIN + ci)
    # gamma/beta: [1, CIN]
    # o_ref:      [H*WP, COUT]   (pad column w=7 is garbage, dropped by the wrapper)

    xc = xc_ref[...]                                          # [9, 8, 128]

    # --- BatchNorm2d training-mode stats, single pass (padded zeros add nothing) --
    x2d = xc.reshape(HP * WP, CIN)                            # [72, 128], free view
    s1 = jnp.sum(x2d, axis=0, keepdims=True)                  # [1, 128]
    s2 = jnp.sum(x2d * x2d, axis=0, keepdims=True)
    mean = s1 * (1.0 / NPIX)
    var = s2 * (1.0 / NPIX) - mean * mean                     # biased var (PyTorch norm)
    inv_std = lax.rsqrt(var + EPS)
    scale2 = gamma_ref[...] * inv_std                         # [1, 128]
    shift2 = beta_ref[...] - mean * scale2                    # [1, 128]
    scale = scale2.reshape(1, 1, CIN)
    shift = shift2.reshape(1, 1, CIN)

    # --- fold the conv zero-pad mask into the shift (separable h/w masks) --------
    # Padded positions have xc == 0, so max(0*scale + 0, 0) == 0 there.
    h_i = lax.broadcasted_iota(jnp.int32, (HP, 1, CIN), 0)
    w_i = lax.broadcasted_iota(jnp.int32, (1, WP, CIN), 1)
    hvalid = jnp.where((h_i >= 1) & (h_i <= H), 1.0, 0.0)     # [9, 1, 128]
    wvalid = jnp.where(w_i < W, 1.0, 0.0)                     # [1, 8, 128]
    shift_m = shift * hvalid * wvalid                         # [9, 8, 128]

    # --- BN + ReLU: one mul + add + max over 9 vregs ------------------------------
    y = jnp.maximum(xc * scale + shift_m, 0.0)                # [9, 8, 128]

    # --- kw = -1 / +1 taps via sublane rotations (XLU; no extra copies/DMA) -------
    y_l = pltpu.roll(y, shift=1, axis=1)        # y_l[:, w] = y[:, w-1]   (kw = 0)
    y_r = pltpu.roll(y, shift=WP - 1, axis=1)   # y_r[:, w] = y[:, w+1]   (kw = 2)
    taps_w = (y_l, y, y_r)

    # --- im2col: every tap is an aligned leading-axis slice; concat on lane axis --
    blocks = [taps_w[kw][kh:kh + H] for kh in range(KH) for kw in range(KW)]
    patch = jnp.concatenate(blocks, axis=-1)                  # [7, 8, 1152]
    patch = patch.reshape(H * WP, KH * KW * CIN)              # [56, 1152], free view

    # --- single full-K MXU matmul, f32 operands + accumulation --------------------
    o_ref[...] = jnp.dot(patch, w_ref[...], preferred_element_type=jnp.float32)


@jax.jit
def bn_relu_conv(x_nchw, w_oihw, gamma, beta):
    """x_nchw: [1,128,7,7] f32; w_oihw: [32,128,3,3]; gamma/beta: [128] -> [1,32,7,7]."""
    N, Cin, Hh, Ww = x_nchw.shape
    assert (N, Cin, Hh, Ww) == (1, CIN, H, W), (N, Cin, Hh, Ww)
    Cout = w_oihw.shape[0]

    # Single centre-padded NHWC copy: H halo rows + one zero pad column to WP=8.
    x_hwc = jnp.transpose(x_nchw[0], (1, 2, 0))               # [7, 7, 128]
    xc = jnp.pad(x_hwc, ((1, 1), (0, 1), (0, 0)))             # [9, 8, 128]

    # Weights: OIHW -> [kh, kw, ci, co] -> [(kh*3+kw)*128 + ci, co].
    # For repeated inference this reformat should be hoisted/cached outside the call.
    w_mat = jnp.transpose(w_oihw, (2, 3, 1, 0)).reshape(KH * KW * CIN, Cout)

    out2d = pl.pallas_call(
        bn_relu_conv_kernel,
        out_shape=jax.ShapeDtypeStruct((H * WP, Cout), jnp.float32),
        in_specs=[pl.BlockSpec(memory_space=pltpu.MemorySpace.VMEM)] * 4,
        out_specs=pl.BlockSpec(memory_space=pltpu.MemorySpace.VMEM),
    )(xc, w_mat, gamma.reshape(1, CIN), beta.reshape(1, CIN))

    out = out2d.reshape(H, WP, Cout)[:, :W, :]                # drop the W-pad column
    return jnp.transpose(out, (2, 0, 1))[None]                # NCHW [1, 32, 7, 7]


def _reference(x_nchw, w_oihw, gamma, beta):
    # Pure-JAX reference of the same module (train-mode BN, ReLU, conv).
    mean = jnp.mean(x_nchw, axis=(0, 2, 3), keepdims=True)
    var = jnp.mean((x_nchw - mean) ** 2, axis=(0, 2, 3), keepdims=True)
    y = (x_nchw - mean) * lax.rsqrt(var + EPS)
    y = y * gamma[None, :, None, None] + beta[None, :, None, None]
    y = jnp.maximum(y, 0.0)
    return lax.conv_general_dilated(
        y, w_oihw, window_strides=(1, 1), padding=((1, 1), (1, 1)),
        dimension_numbers=("NCHW", "OIHW", "NCHW"))


if __name__ == "__main__":
    key = jax.random.PRNGKey(0)
    kx, kw, kg, kb = jax.random.split(key, 4)

    # Shapes implied by the module: x [1,128,7,7], conv weight [32,128,3,3].
    x = jax.random.normal(kx, (1, CIN, H, W), dtype=jnp.float32)
    w = jax.random.normal(kw, (COUT, CIN, KH, KW), dtype=jnp.float32) * 0.05
    gamma = 1.0 + 0.1 * jax.random.normal(kg, (CIN,), dtype=jnp.float32)
    beta = 0.1 * jax.random.normal(kb, (CIN,), dtype=jnp.float32)

    out = jax.block_until_ready(bn_relu_conv(x, w, gamma, beta))
    ref = jax.block_until_ready(_reference(x, w, gamma, beta))

    assert out.shape == (1, COUT, H, W), out.shape
    err = float(jnp.max(jnp.abs(out - ref)))
    assert err < 1e-3, err

    print("KERNEL_OK")
</pallas_src>

<mosaic_0001>
module attributes {stable_mosaic.version = 11 : i64} {
  func.func @bn_relu_conv_kernel(%arg0: memref<9x8x128xf32, #tpu.memory_space<vmem>>, %arg1: memref<1152x32xf32, #tpu.memory_space<vmem>>, %arg2: memref<1x128xf32, #tpu.memory_space<vmem>>, %arg3: memref<1x128xf32, #tpu.memory_space<vmem>>, %arg4: memref<56x32xf32, #tpu.memory_space<vmem>>) attributes {dimension_semantics = [], scalar_prefetch = 0 : i64, scratch_operands = 0 : i64, tpu.core_type = #tpu.core_type<tc>} {
    %c0 = arith.constant 0 : index
    %c0_0 = arith.constant 0 : index
    %c0_1 = arith.constant 0 : index
    %0 = vector.load %arg0[%c0, %c0_0, %c0_1] : memref<9x8x128xf32, #tpu.memory_space<vmem>>, vector<9x8x128xf32>
    %1 = vector.shape_cast %0 : vector<9x8x128xf32> to vector<72x128xf32>
    %cst = arith.constant dense<0.000000e+00> : vector<128xf32>
    %2 = vector.multi_reduction <add>, %1, %cst [0] : vector<72x128xf32> to vector<128xf32>
    %3 = vector.shape_cast %2 : vector<128xf32> to vector<1x128xf32>
    %4 = arith.mulf %1, %1 : vector<72x128xf32>
    %cst_2 = arith.constant dense<0.000000e+00> : vector<128xf32>
    %5 = vector.multi_reduction <add>, %4, %cst_2 [0] : vector<72x128xf32> to vector<128xf32>
    %6 = vector.shape_cast %5 : vector<128xf32> to vector<1x128xf32>
    %cst_3 = arith.constant 0.0204081628 : f32
    %7 = vector.broadcast %cst_3 : f32 to vector<1x128xf32>
    %8 = arith.mulf %3, %7 : vector<1x128xf32>
    %cst_4 = arith.constant 0.0204081628 : f32
    %9 = vector.broadcast %cst_4 : f32 to vector<1x128xf32>
    %10 = arith.mulf %6, %9 : vector<1x128xf32>
    %11 = arith.mulf %8, %8 : vector<1x128xf32>
    %12 = arith.subf %10, %11 : vector<1x128xf32>
    %cst_5 = arith.constant 9.99999974E-6 : f32
    %13 = vector.broadcast %cst_5 : f32 to vector<1x128xf32>
    %14 = arith.addf %12, %13 : vector<1x128xf32>
    %15 = math.rsqrt %14 : vector<1x128xf32>
    %c0_6 = arith.constant 0 : index
    %c0_7 = arith.constant 0 : index
    %16 = vector.load %arg2[%c0_6, %c0_7] : memref<1x128xf32, #tpu.memory_space<vmem>>, vector<1x128xf32>
    %17 = arith.mulf %16, %15 : vector<1x128xf32>
    %c0_8 = arith.constant 0 : index
    %c0_9 = arith.constant 0 : index
    %18 = vector.load %arg3[%c0_8, %c0_9] : memref<1x128xf32, #tpu.memory_space<vmem>>, vector<1x128xf32>
    %19 = arith.mulf %8, %17 : vector<1x128xf32>
    %20 = arith.subf %18, %19 : vector<1x128xf32>
    %21 = vector.shape_cast %17 : vector<1x128xf32> to vector<1x1x128xf32>
    %22 = vector.shape_cast %20 : vector<1x128xf32> to vector<1x1x128xf32>
    %23 = tpu.iota {dimensions = array<i32: 0>} : vector<9x1x128xi32>
    %24 = tpu.iota {dimensions = array<i32: 1>} : vector<1x8x128xi32>
    %c1_i32 = arith.constant 1 : i32
    %25 = vector.broadcast %c1_i32 : i32 to vector<9x1x128xi32>
    %26 = arith.cmpi sge, %23, %25 : vector<9x1x128xi32>
    %c7_i32 = arith.constant 7 : i32
    %27 = vector.broadcast %c7_i32 : i32 to vector<9x1x128xi32>
    %28 = arith.cmpi sle, %23, %27 : vector<9x1x128xi32>
    %29 = arith.andi %26, %28 : vector<9x1x128xi1>
    %cst_10 = arith.constant 1.000000e+00 : f32
    %cst_11 = arith.constant 0.000000e+00 : f32
    %30 = vector.broadcast %cst_10 : f32 to vector<9x1x128xf32>
    %31 = vector.broadcast %cst_11 : f32 to vector<9x1x128xf32>
    %32 = arith.select %29, %30, %31 : vector<9x1x128xi1>, vector<9x1x128xf32>
    %c7_i32_12 = arith.constant 7 : i32
    %33 = vector.broadcast %c7_i32_12 : i32 to vector<1x8x128xi32>
    %34 = arith.cmpi slt, %24, %33 : vector<1x8x128xi32>
    %cst_13 = arith.constant 1.000000e+00 : f32
    %cst_14 = arith.constant 0.000000e+00 : f32
    %35 = vector.broadcast %cst_13 : f32 to vector<1x8x128xf32>
    %36 = vector.broadcast %cst_14 : f32 to vector<1x8x128xf32>
    %37 = arith.select %34, %35, %36 : vector<1x8x128xi1>, vector<1x8x128xf32>
    %38 = vector.broadcast %22 : vector<1x1x128xf32> to vector<9x1x128xf32>
    %39 = arith.mulf %38, %32 : vector<9x1x128xf32>
    %40 = vector.broadcast %39 : vector<9x1x128xf32> to vector<9x8x128xf32>
    %41 = vector.broadcast %37 : vector<1x8x128xf32> to vector<9x8x128xf32>
    %42 = arith.mulf %40, %41 : vector<9x8x128xf32>
    %43 = vector.broadcast %21 : vector<1x1x128xf32> to vector<9x8x128xf32>
    %44 = arith.mulf %0, %43 : vector<9x8x128xf32>
    %45 = arith.addf %44, %42 : vector<9x8x128xf32>
    %cst_15 = arith.constant 0.000000e+00 : f32
    %46 = vector.broadcast %cst_15 : f32 to vector<9x8x128xf32>
    %47 = arith.maximumf %45, %46 : vector<9x8x128xf32>
    %c1_i32_16 = arith.constant 1 : i32
    %48 = tpu.dynamic_rotate %47 by %c1_i32_16 dim 1 : vector<9x8x128xf32>, i32 -> vector<9x8x128xf32>
    %c7_i32_17 = arith.constant 7 : i32
    %49 = tpu.dynamic_rotate %47 by %c7_i32_17 dim 1 : vector<9x8x128xf32>, i32 -> vector<9x8x128xf32>
    %50 = vector.extract_strided_slice %48 {offsets = [0, 0, 0], sizes = [7, 8, 128], strides = [1, 1, 1]} : vector<9x8x128xf32> to vector<7x8x128xf32>
    %51 = vector.extract_strided_slice %47 {offsets = [0, 0, 0], sizes = [7, 8, 128], strides = [1, 1, 1]} : vector<9x8x128xf32> to vector<7x8x128xf32>
    %52 = vector.extract_strided_slice %49 {offsets = [0, 0, 0], sizes = [7, 8, 128], strides = [1, 1, 1]} : vector<9x8x128xf32> to vector<7x8x128xf32>
    %53 = vector.extract_strided_slice %48 {offsets = [1, 0, 0], sizes = [7, 8, 128], strides = [1, 1, 1]} : vector<9x8x128xf32> to vector<7x8x128xf32>
    %54 = vector.extract_strided_slice %47 {offsets = [1, 0, 0], sizes = [7, 8, 128], strides = [1, 1, 1]} : vector<9x8x128xf32> to vector<7x8x128xf32>
    %55 = vector.extract_strided_slice %49 {offsets = [1, 0, 0], sizes = [7, 8, 128], strides = [1, 1, 1]} : vector<9x8x128xf32> to vector<7x8x128xf32>
    %56 = vector.extract_strided_slice %48 {offsets = [2, 0, 0], sizes = [7, 8, 128], strides = [1, 1, 1]} : vector<9x8x128xf32> to vector<7x8x128xf32>
    %57 = vector.extract_strided_slice %47 {offsets = [2, 0, 0], sizes = [7, 8, 128], strides = [1, 1, 1]} : vector<9x8x128xf32> to vector<7x8x128xf32>
    %58 = vector.extract_strided_slice %49 {offsets = [2, 0, 0], sizes = [7, 8, 128], strides = [1, 1, 1]} : vector<9x8x128xf32> to vector<7x8x128xf32>
    %59 = tpu.concatenate %50, %51, %52, %53, %54, %55, %56, %57, %58 in 2 : vector<7x8x128xf32>, vector<7x8x128xf32>, vector<7x8x128xf32>, vector<7x8x128xf32>, vector<7x8x128xf32>, vector<7x8x128xf32>, vector<7x8x128xf32>, vector<7x8x128xf32>, vector<7x8x128xf32> -> vector<7x8x1152xf32>
    %60 = vector.shape_cast %59 : vector<7x8x1152xf32> to vector<56x1152xf32>
    %c0_18 = arith.constant 0 : index
    %c0_19 = arith.constant 0 : index
    %61 = vector.load %arg1[%c0_18, %c0_19] : memref<1152x32xf32, #tpu.memory_space<vmem>>, vector<1152x32xf32>
    %cst_20 = arith.constant dense<0.000000e+00> : vector<56x32xf32>
    %62 = tpu.matmul %60, %61, %cst_20 {dimension_numbers = #tpu.dot_dimension_numbers<[1], [0], [0], [1], [0, 0, 1, 1], [], []>} : vector<56x1152xf32>, vector<1152x32xf32>, vector<56x32xf32> -> vector<56x32xf32>
    %c0_21 = arith.constant 0 : index
    %c0_22 = arith.constant 0 : index
    %63 = vector.load %arg4[%c0_21, %c0_22] : memref<56x32xf32, #tpu.memory_space<vmem>>, vector<56x32xf32>
    tpu.vector_store %arg4[%c0_21, %c0_22], %62 {strides = array<i32>} : memref<56x32xf32, #tpu.memory_space<vmem>>, vector<56x32xf32>,
    return
  }
}

</mosaic_0001>

<llo_original>
// kernel: bn_relu_conv.1
$region0: #{bn_relu_conv.1}
  #allocation0 [shape = 'u32[]', space=smem, size = 0x4, offset = 0x4, fixed_abs, tag = 'smem constant byte address 0x4 - core index']
  #allocation1 [shape = 'u32[144,128]{1,0:T(1,128)}', space=vmem, size = 0x12000, scoped, tag = 'internal scratch']
  %s0 = inlined_call_operand.vmem [shape: f32[9,8,128], index: 0, kind: input, shape index: {}]
  %s1 = inlined_call_operand.vmem [shape: f32[1152,32], index: 1, kind: input, shape index: {}]
  %s2 = inlined_call_operand.vmem [shape: f32[1,128], index: 2, kind: input, shape index: {}]
  %s3 = inlined_call_operand.vmem [shape: f32[1,128], index: 3, kind: input, shape index: {}]
  %s4 = inlined_call_operand.vmem [shape: f32[56,32], index: 4, kind: output, shape index: {}]
  %s5 = sld [smem:[#allocation0]]
  $region26: #{bn_relu_conv.1} parent=0
    _
  %s7 = ssub.s32 1, %s5
  %s8 = scalar_select 0, %s7, %s5
  // Predicated region
  $region2: #{bn_relu_conv.1} parent=0 // pred_check
    _
  $region3: #{bn_relu_conv.1} parent=0 // pred_check_branch
    %10 = sbr.rel (0) target = $region5
  $region4: #{bn_relu_conv.1} parent=0 // pred_region
    _
  $region5: #{bn_relu_conv.1} parent=0 // pred_fallthru
    _
  // Predicated region
  $region6: #{bn_relu_conv.1} parent=0 // pred_check
    _
  $region7: #{bn_relu_conv.1} parent=0 // pred_check_branch
    %12 = sbr.rel (0) target = $region9
  $region8: #{bn_relu_conv.1} parent=0 // pred_region
    _
  $region9: #{bn_relu_conv.1} parent=0 // pred_fallthru
    _
  // Predicated region
  $region10: #{bn_relu_conv.1} parent=0 // pred_check
    _
  $region11: #{bn_relu_conv.1} parent=0 // pred_check_branch
    %14 = sbr.rel (0) target = $region13
  $region12: #{bn_relu_conv.1} parent=0 // pred_region
    _
  $region13: #{bn_relu_conv.1} parent=0 // pred_fallthru
    _
  // Predicated region
  $region14: #{bn_relu_conv.1} parent=0 // pred_check
    _
  $region15: #{bn_relu_conv.1} parent=0 // pred_check_branch
    %16 = sbr.rel (0) target = $region17
  $region16: #{bn_relu_conv.1} parent=0 // pred_region
    _
  $region17: #{bn_relu_conv.1} parent=0 // pred_fallthru
    _
  %v17 = vld [vmem:[%s0] sm:$0xff]
  %v18 = vld [vmem:[%s0 + $0x8] sm:$0xff]
  %v19 = vld [vmem:[%s0 + $0x10] sm:$0xff]
  %v20 = vld [vmem:[%s0 + $0x18] sm:$0xff]
  %v21 = vld [vmem:[%s0 + $0x20] sm:$0xff]
  %v22 = vld [vmem:[%s0 + $0x28] sm:$0xff]
  %v23 = vld [vmem:[%s0 + $0x30] sm:$0xff]
  %v24 = vld [vmem:[%s0 + $0x38] sm:$0xff]
  %v25 = vld [vmem:[%s0 + $0x40] sm:$0xff]
  %v26 = vadd.f32 %v17, %v18
  %v27 = vadd.f32 %v26, %v19
  %v28 = vadd.f32 %v27, %v20
  %v29 = vadd.f32 %v28, %v21
  %v30 = vadd.f32 %v29, %v22
  %v31 = vadd.f32 %v30, %v23
  %v32 = vadd.f32 %v31, %v24
  %v33 = vadd.f32 %v32, %v25
  %v34 = vrot.slane %v33, 4
  %v35 = vadd.f32 %v33, %v34
  %v36 = vrot.slane %v35, 2
  %v37 = vadd.f32 %v35, %v36
  %v38 = vrot.slane %v37, 1
  %v39 = vadd.f32 %v37, %v38
  %v40 = vmul.f32 %v17, %v17
  %v41 = vmul.f32 %v18, %v18
  %v42 = vmul.f32 %v19, %v19
  %v43 = vmul.f32 %v20, %v20
  %v44 = vmul.f32 %v21, %v21
  %v45 = vmul.f32 %v22, %v22
  %v46 = vmul.f32 %v23, %v23
  %v47 = vmul.f32 %v24, %v24
  %v48 = vmul.f32 %v25, %v25
  %v49 = vadd.f32 %v40, %v41
  %v50 = vadd.f32 %v49, %v42
  %v51 = vadd.f32 %v50, %v43
  %v52 = vadd.f32 %v51, %v44
  %v53 = vadd.f32 %v52, %v45
  %v54 = vadd.f32 %v53, %v46
  %v55 = vadd.f32 %v54, %v47
  %v56 = vadd.f32 %v55, %v48
  %v57 = vrot.slane %v56, 4
  %v58 = vadd.f32 %v56, %v57
  %v59 = vrot.slane %v58, 2
  %v60 = vadd.f32 %v58, %v59
  %v61 = vrot.slane %v60, 1
  %v62 = vadd.f32 %v60, %v61
  %v63 = vmul.f32 %v39, 0.020408163
  %v64 = vmul.f32 %v62, 0.020408163
  %v65 = vmul.f32 %v63, %v63
  %v66 = vsub.f32 %v64, %v65
  %v67 = vadd.f32 %v66, 1e-05
  %v68 = vrsqrt.pop %v67
  %v69 = vld [vmem:[%s2] sm:$0x1]
  %v70 = vmul.f32 %v69, %v68
  %v71 = vld [vmem:[%s3] sm:$0x1]
  %v72 = vmul.f32 %v63, %v70
  %v73 = vsub.f32 %v71, %v72
  %v74 = vlaneseq
  %v75 = vshrl.u32 %v74, 7
  %vm76 = vcmp.lt.s32.totalorder %v75, 7
  %v77 = vsel %vm76, 1.0, 0.0
  %v78 = vmul.f32 %v73, 0.0
  %v81 = vlaneseq
  %v82 = vshrl.u32 %v81, 7
  %v83 = vsub.s32 0, %v82
  %v84 = vrot.slane %v78, %v83
  %v85 = vlaneseq
  %v86 = vshrl.u32 %v85, 7
  %v87 = vsub.s32 0, %v86
  %v88 = vrot.slane %v73, %v87
  %v91 = vmul.f32 %v84, %v77
  %v92 = vmul.f32 %v88, %v77
  %v94 = vlaneseq
  %v95 = vshrl.u32 %v94, 7
  %v96 = vsub.s32 0, %v95
  %v97 = vrot.slane %v70, %v96
  %v99 = vmul.f32 %v17, %v97
  %v100 = vmul.f32 %v18, %v97
  %v101 = vmul.f32 %v19, %v97
  %v102 = vmul.f32 %v20, %v97
  %v103 = vmul.f32 %v21, %v97
  %v104 = vmul.f32 %v22, %v97
  %v105 = vmul.f32 %v23, %v97
  %v106 = vmul.f32 %v24, %v97
  %v107 = vmul.f32 %v25, %v97
  %v108 = vadd.f32 %v99, %v91
  %v109 = vadd.f32 %v100, %v92
  %v110 = vadd.f32 %v101, %v92
  %v111 = vadd.f32 %v102, %v92
  %v112 = vadd.f32 %v103, %v92
  %v113 = vadd.f32 %v104, %v92
  %v114 = vadd.f32 %v105, %v92
  %v115 = vadd.f32 %v106, %v92
  %v116 = vadd.f32 %v107, %v91
  %v117 = vmax.f32 %v108, 0.0
  %v118 = vmax.f32 %v109, 0.0
  %v119 = vmax.f32 %v110, 0.0
  %v120 = vmax.f32 %v111, 0.0
  %v121 = vmax.f32 %v112, 0.0
  %v122 = vmax.f32 %v113, 0.0
  %v123 = vmax.f32 %v114, 0.0
  %v124 = vmax.f32 %v115, 0.0
  %v125 = vmax.f32 %v116, 0.0
  %v126 = vrot.slane %v117, 7
  %v127 = vrot.slane %v118, 7
  %v128 = vrot.slane %v119, 7
  %v129 = vrot.slane %v120, 7
  %v130 = vrot.slane %v121, 7
  %v131 = vrot.slane %v122, 7
  %v132 = vrot.slane %v123, 7
  %v133 = vrot.slane %v124, 7
  %v134 = vrot.slane %v125, 7
  %v135 = vrot.slane %v117, 1
  %v136 = vrot.slane %v118, 1
  %v137 = vrot.slane %v119, 1
  %v138 = vrot.slane %v120, 1
  %v139 = vrot.slane %v121, 1
  %v140 = vrot.slane %v122, 1
  %v141 = vrot.slane %v123, 1
  %v142 = vrot.slane %v124, 1
  %v143 = vrot.slane %v125, 1
  %v144 = vld [vmem:[%s1] sm:$0xff]
  %v145 = vld [vmem:[%s1 + $0x8] sm:$0xff]
  %v146 = vld [vmem:[%s1 + $0x10] sm:$0xff]
  %v147 = vld [vmem:[%s1 + $0x18] sm:$0xff]
  %v148 = vld [vmem:[%s1 + $0x20] sm:$0xff]
  %v149 = vld [vmem:[%s1 + $0x28] sm:$0xff]
  %v150 = vld [vmem:[%s1 + $0x30] sm:$0xff]
  %v151 = vld [vmem:[%s1 + $0x38] sm:$0xff]
  %v152 = vld [vmem:[%s1 + $0x40] sm:$0xff]
  %v153 = vld [vmem:[%s1 + $0x48] sm:$0xff]
  %v154 = vld [vmem:[%s1 + $0x50] sm:$0xff]
  %v155 = vld [vmem:[%s1 + $0x58] sm:$0xff]
  %v156 = vld [vmem:[%s1 + $0x60] sm:$0xff]
  %v157 = vld [vmem:[%s1 + $0x68] sm:$0xff]
  %v158 = vld [vmem:[%s1 + $0x70] sm:$0xff]
  %v159 = vld [vmem:[%s1 + $0x78] sm:$0xff]
  %v160 = vld [vmem:[%s1 + $0x80] sm:$0xff]
  %v161 = vld [vmem:[%s1 + $0x88] sm:$0xff]
  %v162 = vld [vmem:[%s1 + $0x90] sm:$0xff]
  %v163 = vld [vmem:[%s1 + $0x98] sm:$0xff]
  %v164 = vld [vmem:[%s1 + $0xa0] sm:$0xff]
  %v165 = vld [vmem:[%s1 + $0xa8] sm:$0xff]
  %v166 = vld [vmem:[%s1 + $0xb0] sm:$0xff]
  %v167 = vld [vmem:[%s1 + $0xb8] sm:$0xff]
  %v168 = vld [vmem:[%s1 + $0xc0] sm:$0xff]
  %v169 = vld [vmem:[%s1 + $0xc8] sm:$0xff]
  %v170 = vld [vmem:[%s1 + $0xd0] sm:$0xff]
  %v171 = vld [vmem:[%s1 + $0xd8] sm:$0xff]
  %v172 = vld [vmem:[%s1 + $0xe0] sm:$0xff]
  %v173 = vld [vmem:[%s1 + $0xe8] sm:$0xff]
  %v174 = vld [vmem:[%s1 + $0xf0] sm:$0xff]
  %v175 = vld [vmem:[%s1 + $0xf8] sm:$0xff]
  %v176 = vld [vmem:[%s1 + $0x100] sm:$0xff]
  %v177 = vld [vmem:[%s1 + $0x108] sm:$0xff]
  %v178 = vld [vmem:[%s1 + $0x110] sm:$0xff]
  %v179 = vld [vmem:[%s1 + $0x118] sm:$0xff]
  %v180 = vld [vmem:[%s1 + $0x120] sm:$0xff]
  %v181 = vld [vmem:[%s1 + $0x128] sm:$0xff]
  %v182 = vld [vmem:[%s1 + $0x130] sm:$0xff]
  %v183 = vld [vmem:[%s1 + $0x138] sm:$0xff]
  %v184 = vld [vmem:[%s1 + $0x140] sm:$0xff]
  %v185 = vld [vmem:[%s1 + $0x148] sm:$0xff]
  %v186 = vld [vmem:[%s1 + $0x150] sm:$0xff]
  %v187 = vld [vmem:[%s1 + $0x158] sm:$0xff]
  %v188 = vld [vmem:[%s1 + $0x160] sm:$0xff]
  %v189 = vld [vmem:[%s1 + $0x168] sm:$0xff]
  %v190 = vld [vmem:[%s1 + $0x170] sm:$0xff]
  %v191 = vld [vmem:[%s1 + $0x178] sm:$0xff]
  %v192 = vld [vmem:[%s1 + $0x180] sm:$0xff]
  %v193 = vld [vmem:[%s1 + $0x188] sm:$0xff]
  %v194 = vld [vmem:[%s1 + $0x190] sm:$0xff]
  %v195 = vld [vmem:[%s1 + $0x198] sm:$0xff]
  %v196 = vld [vmem:[%s1 + $0x1a0] sm:$0xff]
  %v197 = vld [vmem:[%s1 + $0x1a8] sm:$0xff]
  %v198 = vld [vmem:[%s1 + $0x1b0] sm:$0xff]
  %v199 = vld [vmem:[%s1 + $0x1b8] sm:$0xff]
  %v200 = vld [vmem:[%s1 + $0x1c0] sm:$0xff]
  %v201 = vld [vmem:[%s1 + $0x1c8] sm:$0xff]
  %v202 = vld [vmem:[%s1 + $0x1d0] sm:$0xff]
  %v203 = vld [vmem:[%s1 + $0x1d8] sm:$0xff]
  %v204 = vld [vmem:[%s1 + $0x1e0] sm:$0xff]
  %v205 = vld [vmem:[%s1 + $0x1e8] sm:$0xff]
  %v206 = vld [vmem:[%s1 + $0x1f0] sm:$0xff]
  %v207 = vld [vmem:[%s1 + $0x1f8] sm:$0xff]
  %v208 = vld [vmem:[%s1 + $0x200] sm:$0xff]
  %v209 = vld [vmem:[%s1 + $0x208] sm:$0xff]
  %v210 = vld [vmem:[%s1 + $0x210] sm:$0xff]
  %v211 = vld [vmem:[%s1 + $0x218] sm:$0xff]
  %v212 = vld [vmem:[%s1 + $0x220] sm:$0xff]
  %v213 = vld [vmem:[%s1 + $0x228] sm:$0xff]
  %v214 = vld [vmem:[%s1 + $0x230] sm:$0xff]
  %v215 = vld [vmem:[%s1 + $0x238] sm:$0xff]
  %v216 = vld [vmem:[%s1 + $0x240] sm:$0xff]
  %v217 = vld [vmem:[%s1 + $0x248] sm:$0xff]
  %v218 = vld [vmem:[%s1 + $0x250] sm:$0xff]
  %v219 = vld [vmem:[%s1 + $0x258] sm:$0xff]
  %v220 = vld [vmem:[%s1 + $0x260] sm:$0xff]
  %v221 = vld [vmem:[%s1 + $0x268] sm:$0xff]
  %v222 = vld [vmem:[%s1 + $0x270] sm:$0xff]
  %v223 = vld [vmem:[%s1 + $0x278] sm:$0xff]
  %v224 = vld [vmem:[%s1 + $0x280] sm:$0xff]
  %v225 = vld [vmem:[%s1 + $0x288] sm:$0xff]
  %v226 = vld [vmem:[%s1 + $0x290] sm:$0xff]
  %v227 = vld [vmem:[%s1 + $0x298] sm:$0xff]
  %v228 = vld [vmem:[%s1 + $0x2a0] sm:$0xff]
  %v229 = vld [vmem:[%s1 + $0x2a8] sm:$0xff]
  %v230 = vld [vmem:[%s1 + $0x2b0] sm:$0xff]
  %v231 = vld [vmem:[%s1 + $0x2b8] sm:$0xff]
  %v232 = vld [vmem:[%s1 + $0x2c0] sm:$0xff]
  %v233 = vld [vmem:[%s1 + $0x2c8] sm:$0xff]
  %v234 = vld [vmem:[%s1 + $0x2d0] sm:$0xff]
  %v235 = vld [vmem:[%s1 + $0x2d8] sm:$0xff]
  %v236 = vld [vmem:[%s1 + $0x2e0] sm:$0xff]
  %v237 = vld [vmem:[%s1 + $0x2e8] sm:$0xff]
  %v238 = vld [vmem:[%s1 + $0x2f0] sm:$0xff]
  %v239 = vld [vmem:[%s1 + $0x2f8] sm:$0xff]
  %v240 = vld [vmem:[%s1 + $0x300] sm:$0xff]
  %v241 = vld [vmem:[%s1 + $0x308] sm:$0xff]
  %v242 = vld [vmem:[%s1 + $0x310] sm:$0xff]
  %v243 = vld [vmem:[%s1 + $0x318] sm:$0xff]
  %v244 = vld [vmem:[%s1 + $0x320] sm:$0xff]
  %v245 = vld [vmem:[%s1 + $0x328] sm:$0xff]
  %v246 = vld [vmem:[%s1 + $0x330] sm:$0xff]
  %v247 = vld [vmem:[%s1 + $0x338] sm:$0xff]
  %v248 = vld [vmem:[%s1 + $0x340] sm:$0xff]
  %v249 = vld [vmem:[%s1 + $0x348] sm:$0xff]
  %v250 = vld [vmem:[%s1 + $0x350] sm:$0xff]
  %v251 = vld [vmem:[%s1 + $0x358] sm:$0xff]
  %v252 = vld [vmem:[%s1 + $0x360] sm:$0xff]
  %v253 = vld [vmem:[%s1 + $0x368] sm:$0xff]
  %v254 = vld [vmem:[%s1 + $0x370] sm:$0xff]
  %v255 = vld [vmem:[%s1 + $0x378] sm:$0xff]
  %v256 = vld [vmem:[%s1 + $0x380] sm:$0xff]
  %v257 = vld [vmem:[%s1 + $0x388] sm:$0xff]
  %v258 = vld [vmem:[%s1 + $0x390] sm:$0xff]
  %v259 = vld [vmem:[%s1 + $0x398] sm:$0xff]
  %v260 = vld [vmem:[%s1 + $0x3a0] sm:$0xff]
  %v261 = vld [vmem:[%s1 + $0x3a8] sm:$0xff]
  %v262 = vld [vmem:[%s1 + $0x3b0] sm:$0xff]
  %v263 = vld [vmem:[%s1 + $0x3b8] sm:$0xff]
  %v264 = vld [vmem:[%s1 + $0x3c0] sm:$0xff]
  %v265 = vld [vmem:[%s1 + $0x3c8] sm:$0xff]
  %v266 = vld [vmem:[%s1 + $0x3d0] sm:$0xff]
  %v267 = vld [vmem:[%s1 + $0x3d8] sm:$0xff]
  %v268 = vld [vmem:[%s1 + $0x3e0] sm:$0xff]
  %v269 = vld [vmem:[%s1 + $0x3e8] sm:$0xff]
  %v270 = vld [vmem:[%s1 + $0x3f0] sm:$0xff]
  %v271 = vld [vmem:[%s1 + $0x3f8] sm:$0xff]
  %v272 = vld [vmem:[%s1 + $0x400] sm:$0xff]
  %v273 = vld [vmem:[%s1 + $0x408] sm:$0xff]
  %v274 = vld [vmem:[%s1 + $0x410] sm:$0xff]
  %v275 = vld [vmem:[%s1 + $0x418] sm:$0xff]
  %v276 = vld [vmem:[%s1 + $0x420] sm:$0xff]
  %v277 = vld [vmem:[%s1 + $0x428] sm:$0xff]
  %v278 = vld [vmem:[%s1 + $0x430] sm:$0xff]
  %v279 = vld [vmem:[%s1 + $0x438] sm:$0xff]
  %v280 = vld [vmem:[%s1 + $0x440] sm:$0xff]
  %v281 = vld [vmem:[%s1 + $0x448] sm:$0xff]
  %v282 = vld [vmem:[%s1 + $0x450] sm:$0xff]
  %v283 = vld [vmem:[%s1 + $0x458] sm:$0xff]
  %v284 = vld [vmem:[%s1 + $0x460] sm:$0xff]
  %v285 = vld [vmem:[%s1 + $0x468] sm:$0xff]
  %v286 = vld [vmem:[%s1 + $0x470] sm:$0xff]
  %v287 = vld [vmem:[%s1 + $0x478] sm:$0xff]
  %288 = vmatprep.subr.mxu0 0.0
  %289 = vmatpush1.msra.mxu0 %v144
  %290 = vmatprep.subr.mxu0 0.0
  %291 = vmatpush1.msra.mxu0 %v145
  %292 = vmatprep.subr.mxu0 0.0
  %293 = vmatpush1.msra.mxu0 %v146
  %294 = vmatprep.subr.mxu0 0.0
  %295 = vmatpush1.msra.mxu0 %v147
  %296 = vmatprep.subr.mxu0 0.0
  %297 = vmatpush1.msra.mxu0 %v148
  %298 = vmatprep.subr.mxu0 0.0
  %299 = vmatpush1.msra.mxu0 %v149
  %300 = vmatprep.subr.mxu0 0.0
  %301 = vmatpush1.msra.mxu0 %v150
  %302 = vmatprep.subr.mxu0 0.0
  %303 = vmatpush1.msra.mxu0 %v151
  %304 = vmatprep.subr.mxu0 0.0
  %305 = vmatpush1.msra.mxu0 %v152
  %306 = vmatprep.subr.mxu0 0.0
  %307 = vmatpush1.msra.mxu0 %v153
  %308 = vmatprep.subr.mxu0 0.0
  %309 = vmatpush1.msra.mxu0 %v154
  %310 = vmatprep.subr.mxu0 0.0
  %311 = vmatpush1.msra.mxu0 %v155
  %312 = vmatprep.subr.mxu0 0.0
  %313 = vmatpush1.msra.mxu0 %v156
  %314 = vmatprep.subr.mxu0 0.0
  %315 = vmatpush1.msra.mxu0 %v157
  %316 = vmatprep.subr.mxu0 0.0
  %317 = vmatpush1.msra.mxu0 %v158
  %318 = vmatprep.subr.mxu0 0.0
  %319 = vmatpush1.msra.mxu0 %v159
  %320 = vmatprep.subr.mxu0 0.0
  %321 = vmatpush1.msra.mxu0 %v160
  %322 = vmatprep.subr.mxu0 0.0
  %323 = vmatpush1.msra.mxu0 %v161
  %324 = vmatprep.subr.mxu0 0.0
  %325 = vmatpush1.msra.mxu0 %v162
  %326 = vmatprep.subr.mxu0 0.0
  %327 = vmatpush1.msra.mxu0 %v163
  %328 = vmatprep.subr.mxu0 0.0
  %329 = vmatpush1.msra.mxu0 %v164
  %330 = vmatprep.subr.mxu0 0.0
  %331 = vmatpush1.msra.mxu0 %v165
  %332 = vmatprep.subr.mxu0 0.0
  %333 = vmatpush1.msra.mxu0 %v166
  %334 = vmatprep.subr.mxu0 0.0
  %335 = vmatpush1.msra.mxu0 %v167
  %336 = vmatprep.subr.mxu0 0.0
  %337 = vmatpush1.msra.mxu0 %v168
  %338 = vmatprep.subr.mxu0 0.0
  %339 = vmatpush1.msra.mxu0 %v169
  %340 = vmatprep.subr.mxu0 0.0
  %341 = vmatpush1.msra.mxu0 %v170
  %342 = vmatprep.subr.mxu0 0.0
  %343 = vmatpush1.msra.mxu0 %v171
  %344 = vmatprep.subr.mxu0 0.0
  %345 = vmatpush1.msra.mxu0 %v172
  %346 = vmatprep.subr.mxu0 0.0
  %347 = vmatpush1.msra.mxu0 %v173
  %348 = vmatprep.subr.mxu0 0.0
  %349 = vmatpush1.msra.mxu0 %v174
  %350 = vmatprep.subr.mxu0 0.0
  %351 = vmatpush1.msra.mxu0 %v175
  %352 = vmatprep.mubr.f32.mxu0 %v117
  %353 = vmatmul.mubr.f32.gmra.mrb[0].mxu0 %v126
  %v354 = vpop.f32.mrb[0].mxu0
  %v355 = vadd.f32 0.0, %v354
  %v356 = vpop.f32.mrb[0].mxu0
  %357 = vmatprep.mubr.f32.mxu0 %v118
  %358 = vmatmul.mubr.f32.gmra.mrb[0].mxu0 %v127
  %v359 = vpop.f32.mrb[0].mxu0
  %v360 = vadd.f32 0.0, %v359
  %v361 = vpop.f32.mrb[0].mxu0
  %362 = vmatprep.mubr.f32.mxu0 %v119
  %363 = vmatmul.mubr.f32.gmra.mrb[0].mxu0 %v128
  %v364 = vpop.f32.mrb[0].mxu0
  %v365 = vadd.f32 0.0, %v364
  %v366 = vpop.f32.mrb[0].mxu0
  %367 = vmatprep.mubr.f32.mxu0 %v120
  %368 = vmatmul.mubr.f32.gmra.mrb[0].mxu0 %v129
  %v369 = vpop.f32.mrb[0].mxu0
  %v370 = vadd.f32 0.0, %v369
  %v371 = vpop.f32.mrb[0].mxu0
  %372 = vmatprep.mubr.f32.mxu0 %v121
  %373 = vmatmul.mubr.f32.gmra.mrb[0].mxu0 %v130
  %v374 = vpop.f32.mrb[0].mxu0
  %v375 = vadd.f32 0.0, %v374
  %v376 = vpop.f32.mrb[0].mxu0
  %377 = vmatprep.mubr.f32.mxu0 %v122
  %378 = vmatmul.mubr.f32.gmra.mrb[0].mxu0 %v131
  %v379 = vpop.f32.mrb[0].mxu0
  %v380 = vadd.f32 0.0, %v379
  %v381 = vpop.f32.mrb[0].mxu0
  %382 = vmatprep.mubr.f32.mxu0 %v123
  %383 = vmatmul.mubr.f32.gmra.mrb[0].mxu0 %v132
  %v384 = vpop.f32.mrb[0].mxu0
  %v385 = vadd.f32 0.0, %v384
  %v386 = vpop.f32.mrb[0].mxu0
  %387 = vdwg.mxu0
  %388 = vmatprep.subr.mxu0 0.0
  %389 = vmatpush1.msra.mxu0 %v176
  %390 = vmatprep.subr.mxu0 0.0
  %391 = vmatpush1.msra.mxu0 %v177
  %392 = vmatprep.subr.mxu0 0.0
  %393 = vmatpush1.msra.mxu0 %v178
  %394 = vmatprep.subr.mxu0 0.0
  %395 = vmatpush1.msra.mxu0 %v179
  %396 = vmatprep.subr.mxu0 0.0
  %397 = vmatpush1.msra.mxu0 %v180
  %398 = vmatprep.subr.mxu0 0.0
  %399 = vmatpush1.msra.mxu0 %v181
  %400 = vmatprep.subr.mxu0 0.0
  %401 = vmatpush1.msra.mxu0 %v182
  %402 = vmatprep.subr.mxu0 0.0
  %403 = vmatpush1.msra.mxu0 %v183
  %404 = vmatprep.subr.mxu0 0.0
  %405 = vmatpush1.msra.mxu0 %v184
  %406 = vmatprep.subr.mxu0 0.0
  %407 = vmatpush1.msra.mxu0 %v185
  %408 = vmatprep.subr.mxu0 0.0
  %409 = vmatpush1.msra.mxu0 %v186
  %410 = vmatprep.subr.mxu0 0.0
  %411 = vmatpush1.msra.mxu0 %v187
  %412 = vmatprep.subr.mxu0 0.0
  %413 = vmatpush1.msra.mxu0 %v188
  %414 = vmatprep.subr.mxu0 0.0
  %415 = vmatpush1.msra.mxu0 %v189
  %416 = vmatprep.subr.mxu0 0.0
  %417 = vmatpush1.msra.mxu0 %v190
  %418 = vmatprep.subr.mxu0 0.0
  %419 = vmatpush1.msra.mxu0 %v191
  %420 = vmatprep.subr.mxu0 0.0
  %421 = vmatpush1.msra.mxu0 %v192
  %422 = vmatprep.subr.mxu0 0.0
  %423 = vmatpush1.msra.mxu0 %v193
  %424 = vmatprep.subr.mxu0 0.0
  %425 = vmatpush1.msra.mxu0 %v194
  %426 = vmatprep.subr.mxu0 0.0
  %427 = vmatpush1.msra.mxu0 %v195
  %428 = vmatprep.subr.mxu0 0.0
  %429 = vmatpush1.msra.mxu0 %v196
  %430 = vmatprep.subr.mxu0 0.0
  %431 = vmatpush1.msra.mxu0 %v197
  %432 = vmatprep.subr.mxu0 0.0
  %433 = vmatpush1.msra.mxu0 %v198
  %434 = vmatprep.subr.mxu0 0.0
  %435 = vmatpush1.msra.mxu0 %v199
  %436 = vmatprep.subr.mxu0 0.0
  %437 = vmatpush1.msra.mxu0 %v200
  %438 = vmatprep.subr.mxu0 0.0
  %439 = vmatpush1.msra.mxu0 %v201
  %440 = vmatprep.subr.mxu0 0.0
  %441 = vmatpush1.msra.mxu0 %v202
  %442 = vmatprep.subr.mxu0 0.0
  %443 = vmatpush1.msra.mxu0 %v203
  %444 = vmatprep.subr.mxu0 0.0
  %445 = vmatpush1.msra.mxu0 %v204
  %446 = vmatprep.subr.mxu0 0.0
  %447 = vmatpush1.msra.mxu0 %v205
  %448 = vmatprep.subr.mxu0 0.0
  %449 = vmatpush1.msra.mxu0 %v206
  %450 = vmatprep.subr.mxu0 0.0
  %451 = vmatpush1.msra.mxu0 %v207
  %452 = vmatprep.mubr.f32.mxu0 %v127
  %453 = vmatmul.mubr.f32.gmra.mrb[0].mxu0 %v135
  %v454 = vpop.f32.mrb[0].mxu0
  %v455 = vadd.f32 %v355, %v454
  %v456 = vpop.f32.mrb[0].mxu0
  %457 = vmatprep.mubr.f32.mxu0 %v128
  %458 = vmatmul.mubr.f32.gmra.mrb[0].mxu0 %v136
  %v459 = vpop.f32.mrb[0].mxu0
  %v460 = vadd.f32 %v360, %v459
  %v461 = vpop.f32.mrb[0].mxu0
  %462 = vmatprep.mubr.f32.mxu0 %v129
  %463 = vmatmul.mubr.f32.gmra.mrb[0].mxu0 %v137
  %v464 = vpop.f32.mrb[0].mxu0
  %v465 = vadd.f32 %v365, %v464
  %v466 = vpop.f32.mrb[0].mxu0
  %467 = vmatprep.mubr.f32.mxu0 %v130
  %468 = vmatmul.mubr.f32.gmra.mrb[0].mxu0 %v138
  %v469 = vpop.f32.mrb[0].mxu0
  %v470 = vadd.f32 %v370, %v469
  %v471 = vpop.f32.mrb[0].mxu0
  %472 = vmatprep.mubr.f32.mxu0 %v131
  %473 = vmatmul.mubr.f32.gmra.mrb[0].mxu0 %v139
  %v474 = vpop.f32.mrb[0].mxu0
  %v475 = vadd.f32 %v375, %v474
  %v476 = vpop.f32.mrb[0].mxu0
  %477 = vmatprep.mubr.f32.mxu0 %v132
  %478 = vmatmul.mubr.f32.gmra.mrb[0].mxu0 %v140
  %v479 = vpop.f32.mrb[0].mxu0
  %v480 = vadd.f32 %v380, %v479
  %v481 = vpop.f32.mrb[0].mxu0
  %482 = vmatprep.mubr.f32.mxu0 %v133
  %483 = vmatmul.mubr.f32.gmra.mrb[0].mxu0 %v141
  %v484 = vpop.f32.mrb[0].mxu0
  %v485 = vadd.f32 %v385, %v484
  %v486 = vpop.f32.mrb[0].mxu0
  %487 = vdwg.mxu0
  %488 = vmatprep.subr.mxu0 0.0
  %489 = vmatpush1.msra.mxu0 %v208
  %490 = vmatprep.subr.mxu0 0.0
  %491 = vmatpush1.msra.mxu0 %v209
  %492 = vmatprep.subr.mxu0 0.0
  %493 = vmatpush1.msra.mxu0 %v210
  %494 = vmatprep.subr.mxu0 0.0
  %495 = vmatpush1.msra.mxu0 %v211
  %496 = vmatprep.subr.mxu0 0.0
  %497 = vmatpush1.msra.mxu0 %v212
  %498 = vmatprep.subr.mxu0 0.0
  %499 = vmatpush1.msra.mxu0 %v213
  %500 = vmatprep.subr.mxu0 0.0
  %501 = vmatpush1.msra.mxu0 %v214
  %502 = vmatprep.subr.mxu0 0.0
  %503 = vmatpush1.msra.mxu0 %v215
  %504 = vmatprep.subr.mxu0 0.0
  %505 = vmatpush1.msra.mxu0 %v216
  %506 = vmatprep.subr.mxu0 0.0
  %507 = vmatpush1.msra.mxu0 %v217
  %508 = vmatprep.subr.mxu0 0.0
  %509 = vmatpush1.msra.mxu0 %v218
  %510 = vmatprep.subr.mxu0 0.0
  %511 = vmatpush1.msra.mxu0 %v219
  %512 = vmatprep.subr.mxu0 0.0
  %513 = vmatpush1.msra.mxu0 %v220
  %514 = vmatprep.subr.mxu0 0.0
  %515 = vmatpush1.msra.mxu0 %v221
  %516 = vmatprep.subr.mxu0 0.0
  %517 = vmatpush1.msra.mxu0 %v222
  %518 = vmatprep.subr.mxu0 0.0
  %519 = vmatpush1.msra.mxu0 %v223
  %520 = vmatprep.subr.mxu0 0.0
  %521 = vmatpush1.msra.mxu0 %v224
  %522 = vmatprep.subr.mxu0 0.0
  %523 = vmatpush1.msra.mxu0 %v225
  %524 = vmatprep.subr.mxu0 0.0
  %525 = vmatpush1.msra.mxu0 %v226
  %526 = vmatprep.subr.mxu0 0.0
  %527 = vmatpush1.msra.mxu0 %v227
  %528 = vmatprep.subr.mxu0 0.0
  %529 = vmatpush1.msra.mxu0 %v228
  %530 = vmatprep.subr.mxu0 0.0
  %531 = vmatpush1.msra.mxu0 %v229
  %532 = vmatprep.subr.mxu0 0.0
  %533 = vmatpush1.msra.mxu0 %v230
  %534 = vmatprep.subr.mxu0 0.0
  %535 = vmatpush1.msra.mxu0 %v231
  %536 = vmatprep.subr.mxu0 0.0
  %537 = vmatpush1.msra.mxu0 %v232
  %538 = vmatprep.subr.mxu0 0.0
  %539 = vmatpush1.msra.mxu0 %v233
  %540 = vmatprep.subr.mxu0 0.0
  %541 = vmatpush1.msra.mxu0 %v234
  %542 = vmatprep.subr.mxu0 0.0
  %543 = vmatpush1.msra.mxu0 %v235
  %544 = vmatprep.subr.mxu0 0.0
  %545 = vmatpush1.msra.mxu0 %v236
  %546 = vmatprep.subr.mxu0 0.0
  %547 = vmatpush1.msra.mxu0 %v237
  %548 = vmatprep.subr.mxu0 0.0
  %549 = vmatpush1.msra.mxu0 %v238
  %550 = vmatprep.subr.mxu0 0.0
  %551 = vmatpush1.msra.mxu0 %v239
  %552 = vmatprep.mubr.f32.mxu0 %v136
  %553 = vmatmul.mubr.f32.gmra.mrb[0].mxu0 %v118
  %v554 = vpop.f32.mrb[0].mxu0
  %v555 = vadd.f32 %v455, %v554
  %v556 = vpop.f32.mrb[0].mxu0
  %557 = vmatprep.mubr.f32.mxu0 %v137
  %558 = vmatmul.mubr.f32.gmra.mrb[0].mxu0 %v119
  %v559 = vpop.f32.mrb[0].mxu0
  %v560 = vadd.f32 %v460, %v559
  %v561 = vpop.f32.mrb[0].mxu0
  %562 = vmatprep.mubr.f32.mxu0 %v138
  %563 = vmatmul.mubr.f32.gmra.mrb[0].mxu0 %v120
  %v564 = vpop.f32.mrb[0].mxu0
  %v565 = vadd.f32 %v465, %v564
  %v566 = vpop.f32.mrb[0].mxu0
  %567 = vmatprep.mubr.f32.mxu0 %v139
  %568 = vmatmul.mubr.f32.gmra.mrb[0].mxu0 %v121
  %v569 = vpop.f32.mrb[0].mxu0
  %v570 = vadd.f32 %v470, %v569
  %v571 = vpop.f32.mrb[0].mxu0
  %572 = vmatprep.mubr.f32.mxu0 %v140
  %573 = vmatmul.mubr.f32.gmra.mrb[0].mxu0 %v122
  %v574 = vpop.f32.mrb[0].mxu0
  %v575 = vadd.f32 %v475, %v574
  %v576 = vpop.f32.mrb[0].mxu0
  %577 = vmatprep.mubr.f32.mxu0 %v141
  %578 = vmatmul.mubr.f32.gmra.mrb[0].mxu0 %v123
  %v579 = vpop.f32.mrb[0].mxu0
  %v580 = vadd.f32 %v480, %v579
  %v581 = vpop.f32.mrb[0].mxu0
  %582 = vmatprep.mubr.f32.mxu0 %v142
  %583 = vmatmul.mubr.f32.gmra.mrb[0].mxu0 %v124
  %v584 = vpop.f32.mrb[0].mxu0
  %v585 = vadd.f32 %v485, %v584
  %v586 = vpop.f32.mrb[0].mxu0
  %587 = vdwg.mxu0
  %588 = vmatprep.subr.mxu0 0.0
  %589 = vmatpush1.msra.mxu0 %v240
  %590 = vmatprep.subr.mxu0 0.0
  %591 = vmatpush1.msra.mxu0 %v241
  %592 = vmatprep.subr.mxu0 0.0
  %593 = vmatpush1.msra.mxu0 %v242
  %594 = vmatprep.subr.mxu0 0.0
  %595 = vmatpush1.msra.mxu0 %v243
  %596 = vmatprep.subr.mxu0 0.0
  %597 = vmatpush1.msra.mxu0 %v244
  %598 = vmatprep.subr.mxu0 0.0
  %599 = vmatpush1.msra.mxu0 %v245
  %600 = vmatprep.subr.mxu0 0.0
  %601 = vmatpush1.msra.mxu0 %v246
  %602 = vmatprep.subr.mxu0 0.0
  %603 = vmatpush1.msra.mxu0 %v247
  %604 = vmatprep.subr.mxu0 0.0
  %605 = vmatpush1.msra.mxu0 %v248
  %606 = vmatprep.subr.mxu0 0.0
  %607 = vmatpush1.msra.mxu0 %v249
  %608 = vmatprep.subr.mxu0 0.0
  %609 = vmatpush1.msra.mxu0 %v250
  %610 = vmatprep.subr.mxu0 0.0
  %611 = vmatpush1.msra.mxu0 %v251
  %612 = vmatprep.subr.mxu0 0.0
  %613 = vmatpush1.msra.mxu0 %v252
  %614 = vmatprep.subr.mxu0 0.0
  %615 = vmatpush1.msra.mxu0 %v253
  %616 = vmatprep.subr.mxu0 0.0
  %617 = vmatpush1.msra.mxu0 %v254
  %618 = vmatprep.subr.mxu0 0.0
  %619 = vmatpush1.msra.mxu0 %v255
  %620 = vmatprep.subr.mxu0 0.0
  %621 = vmatpush1.msra.mxu0 %v256
  %622 = vmatprep.subr.mxu0 0.0
  %623 = vmatpush1.msra.mxu0 %v257
  %624 = vmatprep.subr.mxu0 0.0
  %625 = vmatpush1.msra.mxu0 %v258
  %626 = vmatprep.subr.mxu0 0.0
  %627 = vmatpush1.msra.mxu0 %v259
  %628 = vmatprep.subr.mxu0 0.0
  %629 = vmatpush1.msra.mxu0 %v260
  %630 = vmatprep.subr.mxu0 0.0
  %631 = vmatpush1.msra.mxu0 %v261
  %632 = vmatprep.subr.mxu0 0.0
  %633 = vmatpush1.msra.mxu0 %v262
  %634 = vmatprep.subr.mxu0 0.0
  %635 = vmatpush1.msra.mxu0 %v263
  %636 = vmatprep.subr.mxu0 0.0
  %637 = vmatpush1.msra.mxu0 %v264
  %638 = vmatprep.subr.mxu0 0.0
  %639 = vmatpush1.msra.mxu0 %v265
  %640 = vmatprep.subr.mxu0 0.0
  %641 = vmatpush1.msra.mxu0 %v266
  %642 = vmatprep.subr.mxu0 0.0
  %643 = vmatpush1.msra.mxu0 %v267
  %644 = vmatprep.subr.mxu0 0.0
  %645 = vmatpush1.msra.mxu0 %v268
  %646 = vmatprep.subr.mxu0 0.0
  %647 = vmatpush1.msra.mxu0 %v269
  %648 = vmatprep.subr.mxu0 0.0
  %649 = vmatpush1.msra.mxu0 %v270
  %650 = vmatprep.subr.mxu0 0.0
  %651 = vmatpush1.msra.mxu0 %v271
  %652 = vmatprep.mubr.f32.mxu0 %v119
  %653 = vmatmul.mubr.f32.gmra.mrb[0].mxu0 %v128
  %v654 = vpop.f32.mrb[0].mxu0
  %v655 = vadd.f32 %v555, %v654
  %v656 = vpop.f32.mrb[0].mxu0
  %657 = vmatprep.mubr.f32.mxu0 %v120
  %658 = vmatmul.mubr.f32.gmra.mrb[0].mxu0 %v129
  %v659 = vpop.f32.mrb[0].mxu0
  %v660 = vadd.f32 %v560, %v659
  %v661 = vpop.f32.mrb[0].mxu0
  %662 = vmatprep.mubr.f32.mxu0 %v121
  %663 = vmatmul.mubr.f32.gmra.mrb[0].mxu0 %v130
  %v664 = vpop.f32.mrb[0].mxu0
  %v665 = vadd.f32 %v565, %v664
  %v666 = vpop.f32.mrb[0].mxu0
  %667 = vmatprep.mubr.f32.mxu0 %v122
  %668 = vmatmul.mubr.f32.gmra.mrb[0].mxu0 %v131
  %v669 = vpop.f32.mrb[0].mxu0
  %v670 = vadd.f32 %v570, %v669
  %v671 = vpop.f32.mrb[0].mxu0
  %672 = vmatprep.mubr.f32.mxu0 %v123
  %673 = vmatmul.mubr.f32.gmra.mrb[0].mxu0 %v132
  %v674 = vpop.f32.mrb[0].mxu0
  %v675 = vadd.f32 %v575, %v674
  %v676 = vpop.f32.mrb[0].mxu0
  %677 = vmatprep.mubr.f32.mxu0 %v124
  %678 = vmatmul.mubr.f32.gmra.mrb[0].mxu0 %v133
  %v679 = vpop.f32.mrb[0].mxu0
  %v680 = vadd.f32 %v580, %v679
  %v681 = vpop.f32.mrb[0].mxu0
  %682 = vmatprep.mubr.f32.mxu0 %v125
  %683 = vmatmul.mubr.f32.gmra.mrb[0].mxu0 %v134
  %v684 = vpop.f32.mrb[0].mxu0
  %v685 = vadd.f32 %v585, %v684
  %v686 = vpop.f32.mrb[0].mxu0
  %687 = vdwg.mxu0
  %688 = vmatprep.subr.mxu0 0.0
  %689 = vmatpush1.msra.mxu0 %v272
  %690 = vmatprep.subr.mxu0 0.0
  %691 = vmatpush1.msra.mxu0 %v273
  %692 = vmatprep.subr.mxu0 0.0
  %693 = vmatpush1.msra.mxu0 %v274
  %694 = vmatprep.subr.mxu0 0.0
  %695 = vmatpush1.msra.mxu0 %v275
  %696 = vmatprep.subr.mxu0 0.0
  %697 = vmatpush1.msra.mxu0 %v276
  %698 = vmatprep.subr.mxu0 0.0
  %699 = vmatpush1.msra.mxu0 %v277
  %700 = vmatprep.subr.mxu0 0.0
  %701 = vmatpush1.msra.mxu0 %v278
  %702 = vmatprep.subr.mxu0 0.0
  %703 = vmatpush1.msra.mxu0 %v279
  %704 = vmatprep.subr.mxu0 0.0
  %705 = vmatpush1.msra.mxu0 %v280
  %706 = vmatprep.subr.mxu0 0.0
  %707 = vmatpush1.msra.mxu0 %v281
  %708 = vmatprep.subr.mxu0 0.0
  %709 = vmatpush1.msra.mxu0 %v282
  %710 = vmatprep.subr.mxu0 0.0
  %711 = vmatpush1.msra.mxu0 %v283
  %712 = vmatprep.subr.mxu0 0.0
  %713 = vmatpush1.msra.mxu0 %v284
  %714 = vmatprep.subr.mxu0 0.0
  %715 = vmatpush1.msra.mxu0 %v285
  %716 = vmatprep.subr.mxu0 0.0
  %717 = vmatpush1.msra.mxu0 %v286
  %718 = vmatprep.subr.mxu0 0.0
  %719 = vmatpush1.msra.mxu0 %v287
  %720 = vmatprep.subr.mxu0 0.0
  %721 = vmatpush1.msra.mxu0 0.0
  %722 = vmatprep.subr.mxu0 0.0
  %723 = vmatpush1.msra.mxu0 0.0
  %724 = vmatprep.subr.mxu0 0.0
  %725 = vmatpush1.msra.mxu0 0.0
  %726 = vmatprep.subr.mxu0 0.0
  %727 = vmatpush1.msra.mxu0 0.0
  %728 = vmatprep.subr.mxu0 0.0
  %729 = vmatpush1.msra.mxu0 0.0
  %730 = vmatprep.subr.mxu0 0.0
  %731 = vmatpush1.msra.mxu0 0.0
  %732 = vmatprep.subr.mxu0 0.0
  %733 = vmatpush1.msra.mxu0 0.0
  %734 = vmatprep.subr.mxu0 0.0
  %735 = vmatpush1.msra.mxu0 0.0
  %736 = vmatprep.subr.mxu0 0.0
  %737 = vmatpush1.msra.mxu0 0.0
  %738 = vmatprep.subr.mxu0 0.0
  %739 = vmatpush1.msra.mxu0 0.0
  %740 = vmatprep.subr.mxu0 0.0
  %741 = vmatpush1.msra.mxu0 0.0
  %742 = vmatprep.subr.mxu0 0.0
  %743 = vmatpush1.msra.mxu0 0.0
  %744 = vmatprep.subr.mxu0 0.0
  %745 = vmatpush1.msra.mxu0 0.0
  %746 = vmatprep.subr.mxu0 0.0
  %747 = vmatpush1.msra.mxu0 0.0
  %748 = vmatprep.subr.mxu0 0.0
  %749 = vmatpush1.msra.mxu0 0.0
  %750 = vmatprep.subr.mxu0 0.0
  %751 = vmatpush1.msra.mxu0 0.0
  %752 = vmatprep.mubr.f32.mxu0 0.0
  %753 = vmatmul.mubr.f32.gmra.mrb[0].mxu0 %v137
  %v754 = vpop.f32.mrb[0].mxu0
  %v755 = vadd.f32 %v655, %v754
  %v756 = vpop.f32.mrb[0].mxu0
  %757 = vmatprep.mubr.f32.mxu0 0.0
  %758 = vmatmul.mubr.f32.gmra.mrb[0].mxu0 %v138
  %v759 = vpop.f32.mrb[0].mxu0
  %v760 = vadd.f32 %v660, %v759
  %v761 = vpop.f32.mrb[0].mxu0
  %762 = vmatprep.mubr.f32.mxu0 0.0
  %763 = vmatmul.mubr.f32.gmra.mrb[0].mxu0 %v139
  %v764 = vpop.f32.mrb[0].mxu0
  %v765 = vadd.f32 %v665, %v764
  %v766 = vpop.f32.mrb[0].mxu0
  %767 = vmatprep.mubr.f32.mxu0 0.0
  %768 = vmatmul.mubr.f32.gmra.mrb[0].mxu0 %v140
  %v769 = vpop.f32.mrb[0].mxu0
  %v770 = vadd.f32 %v670, %v769
  %v771 = vpop.f32.mrb[0].mxu0
  %772 = vmatprep.mubr.f32.mxu0 0.0
  %773 = vmatmul.mubr.f32.gmra.mrb[0].mxu0 %v141
  %v774 = vpop.f32.mrb[0].mxu0
  %v775 = vadd.f32 %v675, %v774
  %v776 = vpop.f32.mrb[0].mxu0
  %777 = vmatprep.mubr.f32.mxu0 0.0
  %778 = vmatmul.mubr.f32.gmra.mrb[0].mxu0 %v142
  %v779 = vpop.f32.mrb[0].mxu0
  %v780 = vadd.f32 %v680, %v779
  %v781 = vpop.f32.mrb[0].mxu0
  %782 = vmatprep.mubr.f32.mxu0 0.0
  %783 = vmatmul.mubr.f32.gmra.mrb[0].mxu0 %v143
  %v784 = vpop.f32.mrb[0].mxu0
  %v785 = vadd.f32 %v685, %v784
  %v786 = vpop.f32.mrb[0].mxu0
  %787 = vdwg.mxu0
  %vm788 = vcmask 261120
  %789 = vst.msk [vmem:[%s4] sm:$0xff] %vm788, %v755
  %790 = vst.msk [vmem:[%s4 + $0x8] sm:$0xff] %vm788, %v760
  %791 = vst.msk [vmem:[%s4 + $0x10] sm:$0xff] %vm788, %v765
  %792 = vst.msk [vmem:[%s4 + $0x18] sm:$0xff] %vm788, %v770
  %793 = vst.msk [vmem:[%s4 + $0x20] sm:$0xff] %vm788, %v775
  %794 = vst.msk [vmem:[%s4 + $0x28] sm:$0xff] %vm788, %v780
  %795 = vst.msk [vmem:[%s4 + $0x30] sm:$0xff] %vm788, %v785
  // Predicated region
  $region18: #{bn_relu_conv.1} parent=0 // pred_check
    _
  $region19: #{bn_relu_conv.1} parent=0 // pred_check_branch
    %797 = sbr.rel (0) target = $region21
  $region20: #{bn_relu_conv.1} parent=0 // pred_region
    _
  $region21: #{bn_relu_conv.1} parent=0 // pred_fallthru
    _
  // Predicated region
  $region22: #{bn_relu_conv.1} parent=0 // pred_check
    _
  $region23: #{bn_relu_conv.1} parent=0 // pred_check_branch
    %799 = sbr.rel (0) target = $region25
  $region24: #{bn_relu_conv.1} parent=0 // pred_region
    _
  $region25: #{bn_relu_conv.1} parent=0 // pred_fallthru
    _

</llo_original>
